<compile_context>
chip_gen: v7x
topology: tpu7x:2x2x1
jax: 0.10.0
libtpu: 0.0.40
codegen_flags: <defaults>
</compile_context>

<pallas_src>
import functools

import jax
import jax.numpy as jnp
from jax.experimental import pallas as pl
from jax.experimental.pallas import tpu as pltpu


def _round_up(x: int, m: int) -> int:
    return (x + m - 1) // m * m


def _vmem_capacity_bytes() -> int:
    try:
        return int(pltpu.get_tpu_info().vmem_capacity_bytes)
    except Exception:
        return 64 * 1024 * 1024  # conservative fallback (v7x per-TensorCore)


def _linear_kernel(x_ref, w_ref, b_ref, o_ref):
    # x_ref: (tm, D) f32/bf16, w_ref: (D, tn) bf16 (pre-transposed, lane-dense),
    # b_ref: (1, tn) f32, o_ref: (tm, tn) f32.
    x = x_ref[...].astype(w_ref.dtype)  # no-op if the wrapper already pre-cast X
    acc = jnp.dot(x, w_ref[...], preferred_element_type=jnp.float32)  # f32 MXU acc
    o_ref[...] = (acc + b_ref[...]).astype(o_ref.dtype)


def prepare_linear_classifier_params(weight, bias, compute_dtype=jnp.bfloat16):
    """One-time prep of the frozen probe params (hoisted out of the per-call path).

    weight: [C, D] f32 (PyTorch nn.Linear layout), bias: [C] f32.
    Returns (w_t [D, C] compute_dtype, bias2 [1, C] f32).
    """
    w_t = jnp.asarray(weight).T.astype(compute_dtype)
    b2 = jnp.asarray(bias).reshape(1, -1).astype(jnp.float32)
    return w_t, b2


@functools.partial(jax.jit, static_argnames=("tm", "tn"))
def linear_classifier_forward(x, w_t, bias2, *, tm=256, tn=1024):
    """y = x @ W^T + b, with W supplied pre-transposed as w_t = W.T of shape [D, C]."""
    B, D = x.shape
    D2, C = w_t.shape
    assert D == D2, (x.shape, w_t.shape)
    bias2 = bias2.reshape(1, C)

    x_item = jnp.dtype(x.dtype).itemsize
    w_item = jnp.dtype(w_t.dtype).itemsize

    vmem_cap = _vmem_capacity_bytes()
    vmem_budget = int(0.70 * vmem_cap)  # leave headroom for Mosaic scratch/semaphores

    def block_bytes(tm_e, tn_e):
        # Double-buffered VMEM footprint estimate with (sublane, lane) rounding.
        d_lane = _round_up(D, 128)
        d_sub = _round_up(D, 8)
        tn_l = _round_up(tn_e, 128)
        tm_s = _round_up(tm_e, 8)
        per_buf = (tm_s * d_lane * x_item      # X tile
                   + d_sub * tn_l * w_item     # W tile
                   + 8 * tn_l * 4              # bias tile
                   + tm_s * tn_l * 4)          # output tile (f32)
        return 2 * per_buf

    # ---- Tile selection (no padding: grid uses cdiv, boundary blocks masked).
    # Small-batch fast path: whole B in one tile when it fits the default tile.
    tm_eff = B if B <= tm else tm
    # Whole-class-dim-resident path when it fits the VMEM budget; else a
    # 128-multiple class tile (< C in that branch since C > tn).
    if C <= tn or block_bytes(tm_eff, C) <= vmem_budget:
        tn_eff = C
    else:
        tn_eff = tn
    # Last-resort shrink for very large D so we never exceed the VMEM budget.
    while block_bytes(tm_eff, tn_eff) > vmem_budget and (tm_eff > 8 or tn_eff > 128):
        if tm_eff > 8:
            tm_eff = max(8, (tm_eff // 2) // 8 * 8)
        else:
            tn_eff = max(128, (tn_eff // 2) // 128 * 128)

    num_i = pl.cdiv(B, tm_eff)  # batch tiles
    num_j = pl.cdiv(C, tn_eff)  # class tiles

    # X re-fetch factor is at most num_j; when it is small, stream f32 X and
    # cast inside the kernel instead of paying a separate wrapper cast pass.
    if num_j > 2 and x.dtype != w_t.dtype:
        x_in = x.astype(w_t.dtype)
    else:
        x_in = x
    xi_item = jnp.dtype(x_in.dtype).itemsize

    # ---- Grid construction: no reduction axis, every axis parallel.
    if num_j == 1:
        grid = (num_i,)
        x_map = lambda i: (i, 0)
        w_map = lambda i: (0, 0)   # constant block index -> W stays resident, one DMA
        b_map = lambda i: (0, 0)
        o_map = lambda i: (i, 0)
        dim_sem = ("parallel",)
        x_refetch, w_refetch = 1, 1
    else:
        # Pick the ordering with the smaller HBM traffic.
        classes_outer = (C * D + num_j * B * D) <= (B * D + num_i * C * D)
        if classes_outer:
            grid = (num_j, num_i)
            x_map = lambda j, i: (i, 0)
            w_map = lambda j, i: (0, j)
            b_map = lambda j, i: (0, j)
            o_map = lambda j, i: (i, j)
            x_refetch, w_refetch = num_j, 1
        else:
            grid = (num_i, num_j)
            x_map = lambda i, j: (i, 0)
            w_map = lambda i, j: (0, j)
            b_map = lambda i, j: (0, j)
            o_map = lambda i, j: (i, j)
            x_refetch, w_refetch = 1, num_i
        dim_sem = ("parallel", "parallel")

    # block_bytes already includes the 2x double-buffer factor; add ~25%
    # headroom, floor at the 32 MiB default, cap below physical VMEM.
    vmem_limit = int(min(vmem_budget,
                         max(32 * 1024 * 1024,
                             int(1.25 * block_bytes(tm_eff, tn_eff)))))

    out = pl.pallas_call(
        _linear_kernel,
        out_shape=jax.ShapeDtypeStruct((B, C), jnp.float32),
        grid_spec=pltpu.PrefetchScalarGridSpec(
            num_scalar_prefetch=0,
            grid=grid,
            in_specs=[
                pl.BlockSpec((tm_eff, D), x_map),   # X row tile, D unblocked (full extent)
                pl.BlockSpec((D, tn_eff), w_map),   # W tile in natural [K, N] MXU layout
                pl.BlockSpec((1, tn_eff), b_map),   # bias tile (f32)
            ],
            out_specs=pl.BlockSpec((tm_eff, tn_eff), o_map),
        ),
        compiler_params=pltpu.CompilerParams(
            dimension_semantics=dim_sem,
            vmem_limit_bytes=vmem_limit,
        ),
        cost_estimate=pl.CostEstimate(
            flops=2 * B * D * C,
            transcendentals=0,
            bytes_accessed=(x_refetch * B * D * xi_item
                            + w_refetch * C * D * w_item
                            + C * 4
                            + B * C * 4),
        ),
    )(x_in, w_t, bias2)

    return out


if __name__ == "__main__":
    # Shapes consistent with LinearClassifier(out_dim=32, num_classes=1000):
    # ragged C=1000 exercises the masked-boundary path; B=8 exercises the
    # single-step small-batch fast path.
    B, D, C = 8, 32, 1000

    key = jax.random.PRNGKey(0)
    kx, kw = jax.random.split(key)

    x = jax.random.normal(kx, (B, D), dtype=jnp.float32)

    # Deterministic param init matching module __init__ semantics:
    #   weight ~ N(0, 0.01) in PyTorch [C, D] layout, bias = 0.
    weight = 0.01 * jax.random.normal(kw, (C, D), dtype=jnp.float32)
    bias = jnp.zeros((C,), dtype=jnp.float32)

    # One-time frozen-parameter prep (outside the per-call jit path).
    w_t, b2 = prepare_linear_classifier_params(weight, bias)

    out = linear_classifier_forward(x, w_t, b2)
    out = jax.block_until_ready(out)

    # Reference check against plain JAX (same math as nn.Linear).  Kernel uses
    # bf16 inputs with f32 accumulation, so compare with a loose tolerance.
    ref = x @ weight.T + bias
    assert out.shape == (B, C) and out.dtype == jnp.float32
    assert jnp.allclose(out, ref, atol=1e-2, rtol=1e-2), float(
        jnp.max(jnp.abs(out - ref)))

    print("KERNEL_OK")
</pallas_src>

<mosaic_0001>
module attributes {stable_mosaic.version = 11 : i64} {
  func.func @_linear_kernel(%arg0: i32, %arg1: memref<8x32xf32, #tpu.memory_space<vmem>>, %arg2: memref<32x1000xbf16, #tpu.memory_space<vmem>>, %arg3: memref<1x1000xf32, #tpu.memory_space<vmem>>, %arg4: memref<8x1000xf32, #tpu.memory_space<vmem>>) attributes {dimension_semantics = [#tpu.dimension_semantics<parallel>], iteration_bounds = array<i64: 1>, scalar_prefetch = 0 : i64, scratch_operands = 0 : i64, tpu.core_type = #tpu.core_type<tc>, window_params = [{transform_indices = @transform_0, window_bounds = array<i64: 8, 32>}, {pipeline_mode = #tpu.pipeline_mode<synchronous>, transform_indices = @transform_1, window_bounds = array<i64: 32, 1000>}, {pipeline_mode = #tpu.pipeline_mode<synchronous>, transform_indices = @transform_2, window_bounds = array<i64: 1, 1000>}, {transform_indices = @transform_3, window_bounds = array<i64: 8, 1000>}]} {
    %c0 = arith.constant 0 : index
    %c0_0 = arith.constant 0 : index
    %0 = vector.load %arg1[%c0, %c0_0] : memref<8x32xf32, #tpu.memory_space<vmem>>, vector<8x32xf32>
    %1 = arith.truncf %0 : vector<8x32xf32> to vector<8x32xbf16>
    %c0_1 = arith.constant 0 : index
    %c0_2 = arith.constant 0 : index
    %2 = vector.load %arg2[%c0_1, %c0_2] : memref<32x1000xbf16, #tpu.memory_space<vmem>>, vector<32x1000xbf16>
    %cst = arith.constant dense<0.000000e+00> : vector<8x1000xf32>
    %3 = tpu.matmul %1, %2, %cst {dimension_numbers = #tpu.dot_dimension_numbers<[1], [0], [0], [1], [0, 0, 1, 1], [], []>} : vector<8x32xbf16>, vector<32x1000xbf16>, vector<8x1000xf32> -> vector<8x1000xf32>
    %c0_3 = arith.constant 0 : index
    %c0_4 = arith.constant 0 : index
    %4 = vector.load %arg3[%c0_3, %c0_4] : memref<1x1000xf32, #tpu.memory_space<vmem>>, vector<1x1000xf32>
    %5 = vector.broadcast %4 : vector<1x1000xf32> to vector<8x1000xf32>
    %6 = arith.addf %3, %5 : vector<8x1000xf32>
    %c0_5 = arith.constant 0 : index
    %c0_6 = arith.constant 0 : index
    %7 = vector.load %arg4[%c0_5, %c0_6] : memref<8x1000xf32, #tpu.memory_space<vmem>>, vector<8x1000xf32>
    tpu.vector_store %arg4[%c0_5, %c0_6], %6 {strides = array<i32>} : memref<8x1000xf32, #tpu.memory_space<vmem>>, vector<8x1000xf32>,
    return
  }
  func.func @transform_0(%arg0: i32) -> (i32, i32) {
    %c0_i32 = arith.constant 0 : i32
    %c0_i32_0 = arith.constant 0 : i32
    return %arg0, %c0_i32 : i32, i32
  }
  func.func @transform_1(%arg0: i32) -> (i32, i32) {
    %c0_i32 = arith.constant 0 : i32
    %c0_i32_0 = arith.constant 0 : i32
    %c0_i32_1 = arith.constant 0 : i32
    return %c0_i32, %c0_i32_0 : i32, i32
  }
  func.func @transform_2(%arg0: i32) -> (i32, i32) {
    %c0_i32 = arith.constant 0 : i32
    %c0_i32_0 = arith.constant 0 : i32
    %c0_i32_1 = arith.constant 0 : i32
    return %c0_i32, %c0_i32_0 : i32, i32
  }
  func.func @transform_3(%arg0: i32) -> (i32, i32) {
    %c0_i32 = arith.constant 0 : i32
    %c0_i32_0 = arith.constant 0 : i32
    return %arg0, %c0_i32 : i32, i32
  }
}

</mosaic_0001>

<llo_original>
// kernel: linear_classifier_forward.1
$region0: #{linear_classifier_forward.1}
  #allocation0 [shape = 'u32[]', space=smem, size = 0x4, offset = 0x4, fixed_abs, tag = 'smem constant byte address 0x4 - core index']
  #allocation1 [shape = 'u32[144,128]{1,0:T(1,128)}', space=vmem, size = 0x12000, scoped, tag = 'internal scratch']
  %s0 = inlined_call_operand.hbm [shape: f32[8,32], index: 0, kind: input, shape index: {}]
  %s1 = inlined_call_operand.hbm [shape: bf16[32,1000], index: 1, kind: input, shape index: {}]
  %s2 = inlined_call_operand.hbm [shape: f32[1,1000], index: 2, kind: input, shape index: {}]
  %s3 = inlined_call_operand.hbm [shape: f32[8,1000], index: 3, kind: output, shape index: {}]
  %s4 = sld [smem:[#allocation0]]
  $region34: #{linear_classifier_forward.1} parent=0
    _
  %s6 = ssub.s32 1, %s4
  %s7 = scalar_select 0, %s6, %s4
  $region1: #{linear_classifier_forward.1} parent=0
    #allocation2 [shape = 'u8[4096]{0}', space=vmem, size = 0x1000, scoped, tag = 'input window, operand 0, single buffered']
    #allocation3 [shape = 's32[1]{0}', space=sflag, size = 0x4, scoped, tag = 'scoped memory for linear_classifier_forward.1']
    #allocation4 [shape = 's32[1]{0}', space=sflag, size = 0x4, scoped, tag = 'scoped memory for linear_classifier_forward.1']
    #allocation5 [shape = 'u8[65536]{0}', space=vmem, size = 0x10000, scoped, tag = 'input window, operand 1, single buffered']
    #allocation6 [shape = 's32[1]{0}', space=sflag, size = 0x4, scoped, tag = 'scoped memory for linear_classifier_forward.1']
    #allocation7 [shape = 'u8[4096]{0}', space=vmem, size = 0x1000, scoped, tag = 'input window, operand 2, single buffered']
    #allocation8 [shape = 'u8[32768]{0}', space=vmem, size = 0x8000, scoped, tag = 'output window, operand 0, single buffered']
    %8 = vsyncpa [#allocation3], 0
    %9 = vsyncpa [#allocation6], 0
    %10 = vsyncpa [#allocation4], 0
    // Predicated region
    $region2: #{linear_classifier_forward.1} parent=1 // pred_check
      _
    $region3: #{linear_classifier_forward.1} parent=1 // pred_check_branch
      %12 = sbr.rel (0) target = $region5
    $region4: #{linear_classifier_forward.1} parent=1 // pred_region
      %s14 = ssub.s32 128, 128
      %15 = vsyncadd [#allocation3], %s14
      %s17 = sshll.u32 [#allocation2], 4
      %s18 = int_to_ptr.vmem [resolvable:$true] %s17
      %20 = dma.hbm_to_vmem [thread:$0]  %s0, 128, %s18, [#allocation3]
    $region5: #{linear_classifier_forward.1} parent=1 // pred_fallthru
      _
    // Predicated region
    $region6: #{linear_classifier_forward.1} parent=1 // pred_check
      _
    $region7: #{linear_classifier_forward.1} parent=1 // pred_check_branch
      %22 = sbr.rel (0) target = $region9
    $region8: #{linear_classifier_forward.1} parent=1 // pred_region
      %s24 = ssub.s32 2048, 2048
      %25 = vsyncadd [#allocation6], %s24
      %s26 = sshll.u32 [#allocation5], 4
      %s27 = int_to_ptr.vmem [resolvable:$true] %s26
      %32 = dma.hbm_to_vmem [thread:$0]  %s1, 2048, %s27, [#allocation6], 512, 512, 32
    $region9: #{linear_classifier_forward.1} parent=1 // pred_fallthru
      _
    // Predicated region
    $region10: #{linear_classifier_forward.1} parent=1 // pred_check
      _
    $region11: #{linear_classifier_forward.1} parent=1 // pred_check_branch
      %34 = sbr.rel (0) target = $region13
    $region12: #{linear_classifier_forward.1} parent=1 // pred_region
      %s36 = ssub.s32 128, 128
      %37 = vsyncadd [#allocation6], %s36
      %s39 = sshll.u32 [#allocation7], 4
      %s40 = int_to_ptr.vmem [resolvable:$true] %s39
      %42 = dma.hbm_to_vmem [thread:$0]  %s2, 128, %s40, [#allocation6]
    $region13: #{linear_classifier_forward.1} parent=1 // pred_fallthru
      _
    // Predicated region
    $region14: #{linear_classifier_forward.1} parent=1 // pred_check
      _
    $region15: #{linear_classifier_forward.1} parent=1 // pred_check_branch
      %44 = sbr.rel (0) target = $region17
    $region16: #{linear_classifier_forward.1} parent=1 // pred_region
      %45 = dma.done [#allocation3], 128
    $region17: #{linear_classifier_forward.1} parent=1 // pred_fallthru
      _
    // Predicated region
    $region18: #{linear_classifier_forward.1} parent=1 // pred_check
      _
    $region19: #{linear_classifier_forward.1} parent=1 // pred_check_branch
      %47 = sbr.rel (0) target = $region21
    $region20: #{linear_classifier_forward.1} parent=1 // pred_region
      %48 = dma.done [#allocation6], 2048
    $region21: #{linear_classifier_forward.1} parent=1 // pred_fallthru
      _
    // Predicated region
    $region22: #{linear_classifier_forward.1} parent=1 // pred_check
      _
    $region23: #{linear_classifier_forward.1} parent=1 // pred_check_branch
      %50 = sbr.rel (0) target = $region25
    $region24: #{linear_classifier_forward.1} parent=1 // pred_region
      %51 = dma.done [#allocation6], 128
    $region25: #{linear_classifier_forward.1} parent=1 // pred_fallthru
      _
    %v53 = vld [vmem:[#allocation2] sm:$0xff]
    %v54 = vpack.c.bf16 %v53, %v53
    %v55 = vld [vmem:[#allocation5] sm:$0xff]
    %v56 = vld [vmem:[#allocation5 + $0x8] sm:$0xff]
    %v57 = vld [vmem:[#allocation5 + $0x10] sm:$0xff]
    %v58 = vld [vmem:[#allocation5 + $0x18] sm:$0xff]
    %v59 = vld [vmem:[#allocation5 + $0x20] sm:$0xff]
    %v60 = vld [vmem:[#allocation5 + $0x28] sm:$0xff]
    %v61 = vld [vmem:[#allocation5 + $0x30] sm:$0xff]
    %v62 = vld [vmem:[#allocation5 + $0x38] sm:$0xff]
    %v63 = vld [vmem:[#allocation5 + $0x40] sm:$0xff]
    %v64 = vld [vmem:[#allocation5 + $0x48] sm:$0xff]
    %v65 = vld [vmem:[#allocation5 + $0x50] sm:$0xff]
    %v66 = vld [vmem:[#allocation5 + $0x58] sm:$0xff]
    %v67 = vld [vmem:[#allocation5 + $0x60] sm:$0xff]
    %v68 = vld [vmem:[#allocation5 + $0x68] sm:$0xff]
    %v69 = vld [vmem:[#allocation5 + $0x70] sm:$0xff]
    %v70 = vld [vmem:[#allocation5 + $0x78] sm:$0xff]
    %v71 = vld [vmem:[#allocation7] sm:$0xff]
    %v73 = vlaneseq
    %v74 = vshrl.u32 %v73, 7
    %v75 = vsub.s32 0, %v74
    %v76 = vrot.slane %v71, %v75
    %v77 = vlaneseq
    %v78 = vshrl.u32 %v77, 7
    %v79 = vsub.s32 1, %v78
    %v80 = vrot.slane %v71, %v79
    %v81 = vlaneseq
    %v82 = vshrl.u32 %v81, 7
    %v83 = vsub.s32 2, %v82
    %v84 = vrot.slane %v71, %v83
    %v85 = vlaneseq
    %v86 = vshrl.u32 %v85, 7
    %v87 = vsub.s32 3, %v86
    %v88 = vrot.slane %v71, %v87
    %v89 = vlaneseq
    %v90 = vshrl.u32 %v89, 7
    %v91 = vsub.s32 4, %v90
    %v92 = vrot.slane %v71, %v91
    %v93 = vlaneseq
    %v94 = vshrl.u32 %v93, 7
    %v95 = vsub.s32 5, %v94
    %v96 = vrot.slane %v71, %v95
    %v97 = vlaneseq
    %v98 = vshrl.u32 %v97, 7
    %v99 = vsub.s32 6, %v98
    %v100 = vrot.slane %v71, %v99
    %v101 = vlaneseq
    %v102 = vshrl.u32 %v101, 7
    %v103 = vsub.s32 7, %v102
    %v104 = vrot.slane %v71, %v103
    %v129 = vunpack.c.l.b16 %v55
    %v130 = vunpack.c.h.b16 %v55
    %v131 = vunpack.c.l.b16 %v56
    %v132 = vunpack.c.h.b16 %v56
    %v133 = vunpack.c.l.b16 %v57
    %v134 = vunpack.c.h.b16 %v57
    %v135 = vunpack.c.l.b16 %v58
    %v136 = vunpack.c.h.b16 %v58
    %v137 = vunpack.c.l.b16 %v59
    %v138 = vunpack.c.h.b16 %v59
    %v139 = vunpack.c.l.b16 %v60
    %v140 = vunpack.c.h.b16 %v60
    %v141 = vunpack.c.l.b16 %v61
    %v142 = vunpack.c.h.b16 %v61
    %v143 = vunpack.c.l.b16 %v62
    %v144 = vunpack.c.h.b16 %v62
    %v145 = vunpack.c.l.b16 %v63
    %v146 = vunpack.c.h.b16 %v63
    %v147 = vunpack.c.l.b16 %v64
    %v148 = vunpack.c.h.b16 %v64
    %v149 = vunpack.c.l.b16 %v65
    %v150 = vunpack.c.h.b16 %v65
    %v151 = vunpack.c.l.b16 %v66
    %v152 = vunpack.c.h.b16 %v66
    %v153 = vunpack.c.l.b16 %v67
    %v154 = vunpack.c.h.b16 %v67
    %v155 = vunpack.c.l.b16 %v68
    %v156 = vunpack.c.h.b16 %v68
    %v157 = vunpack.c.l.b16 %v69
    %v158 = vunpack.c.h.b16 %v69
    %v159 = vunpack.c.l.b16 %v70
    %v160 = vunpack.c.h.b16 %v70
    %v161 = vpack.c.b16 %v137, %v129
    %v162 = vpack.c.b16 %v138, %v130
    %v163 = vpack.c.b16 %v139, %v131
    %v164 = vpack.c.b16 %v140, %v132
    %v165 = vpack.c.b16 %v141, %v133
    %v166 = vpack.c.b16 %v142, %v134
    %v167 = vpack.c.b16 %v143, %v135
    %v168 = vpack.c.b16 %v144, %v136
    %v169 = vpack.c.b16 %v153, %v145
    %v170 = vpack.c.b16 %v154, %v146
    %v171 = vpack.c.b16 %v155, %v147
    %v172 = vpack.c.b16 %v156, %v148
    %v173 = vpack.c.b16 %v157, %v149
    %v174 = vpack.c.b16 %v158, %v150
    %v175 = vpack.c.b16 %v159, %v151
    %v176 = vpack.c.b16 %v160, %v152
    %vm193 = vcmask 261120
    %v195 = vsel %vm193, %v54, 0
    %197 = vmatprep.subr.bf16.mxu0 %v162
    %198 = vmatpush1.bf16.msra.mxu0 %v161
    %199 = vmatprep.subr.bf16.mxu0 %v170
    %200 = vmatpush1.bf16.msra.mxu0 %v169
    %201 = vmatprep.subr.bf16.mxu0 0
    %202 = vmatpush1.bf16.msra.mxu0 0
    %203 = vmatprep.subr.bf16.mxu0 0
    %204 = vmatpush1.bf16.msra.mxu0 0
    %205 = vmatprep.subr.bf16.mxu0 0
    %206 = vmatpush1.bf16.msra.mxu0 0
    %207 = vmatprep.subr.bf16.mxu0 0
    %208 = vmatpush1.bf16.msra.mxu0 0
    %209 = vmatprep.subr.bf16.mxu0 0
    %210 = vmatpush1.bf16.msra.mxu0 0
    %211 = vmatprep.subr.bf16.mxu0 0
    %212 = vmatpush1.bf16.msra.mxu0 0
    %213 = vmatprep.subr.bf16.mxu0 0
    %214 = vmatpush1.bf16.msra.mxu0 0
    %215 = vmatprep.subr.bf16.mxu0 0
    %216 = vmatpush1.bf16.msra.mxu0 0
    %217 = vmatprep.subr.bf16.mxu0 0
    %218 = vmatpush1.bf16.msra.mxu0 0
    %219 = vmatprep.subr.bf16.mxu0 0
    %220 = vmatpush1.bf16.msra.mxu0 0
    %221 = vmatprep.subr.bf16.mxu0 0
    %222 = vmatpush1.bf16.msra.mxu0 0
    %223 = vmatprep.subr.bf16.mxu0 0
    %224 = vmatpush1.bf16.msra.mxu0 0
    %225 = vmatprep.subr.bf16.mxu0 0
    %226 = vmatpush1.bf16.msra.mxu0 0
    %227 = vmatprep.subr.bf16.mxu0 0
    %228 = vmatpush1.bf16.msra.mxu0 0
    %229 = vmatprep.mubr.bf16.mxu0 0
    %230 = vmatmul.mubr.bf16.gmra.mrb[0].mxu0 %v195
    %v231 = vpop.f32.mrb[0].mxu0
    %v232 = vadd.f32 %v76, %v231
    %v233 = vpop.f32.mrb[0].mxu0
    %v234 = vadd.f32 %v80, %v233
    %v235 = vpop.f32.mrb[0].mxu0
    %v236 = vpop.f32.mrb[0].mxu0
    %237 = vdwg.mxu0
    %238 = vmatprep.subr.bf16.mxu0 %v164
    %239 = vmatpush1.bf16.msra.mxu0 %v163
    %240 = vmatprep.subr.bf16.mxu0 %v172
    %241 = vmatpush1.bf16.msra.mxu0 %v171
    %242 = vmatprep.subr.bf16.mxu0 0
    %243 = vmatpush1.bf16.msra.mxu0 0
    %244 = vmatprep.subr.bf16.mxu0 0
    %245 = vmatpush1.bf16.msra.mxu0 0
    %246 = vmatprep.subr.bf16.mxu0 0
    %247 = vmatpush1.bf16.msra.mxu0 0
    %248 = vmatprep.subr.bf16.mxu0 0
    %249 = vmatpush1.bf16.msra.mxu0 0
    %250 = vmatprep.subr.bf16.mxu0 0
    %251 = vmatpush1.bf16.msra.mxu0 0
    %252 = vmatprep.subr.bf16.mxu0 0
    %253 = vmatpush1.bf16.msra.mxu0 0
    %254 = vmatprep.subr.bf16.mxu0 0
    %255 = vmatpush1.bf16.msra.mxu0 0
    %256 = vmatprep.subr.bf16.mxu0 0
    %257 = vmatpush1.bf16.msra.mxu0 0
    %258 = vmatprep.subr.bf16.mxu0 0
    %259 = vmatpush1.bf16.msra.mxu0 0
    %260 = vmatprep.subr.bf16.mxu0 0
    %261 = vmatpush1.bf16.msra.mxu0 0
    %262 = vmatprep.subr.bf16.mxu0 0
    %263 = vmatpush1.bf16.msra.mxu0 0
    %264 = vmatprep.subr.bf16.mxu0 0
    %265 = vmatpush1.bf16.msra.mxu0 0
    %266 = vmatprep.subr.bf16.mxu0 0
    %267 = vmatpush1.bf16.msra.mxu0 0
    %268 = vmatprep.subr.bf16.mxu0 0
    %269 = vmatpush1.bf16.msra.mxu0 0
    %270 = vmatprep.mubr.bf16.mxu0 0
    %271 = vmatmul.mubr.bf16.gmra.mrb[0].mxu0 %v195
    %v272 = vpop.f32.mrb[0].mxu0
    %v273 = vadd.f32 %v84, %v272
    %v274 = vpop.f32.mrb[0].mxu0
    %v275 = vadd.f32 %v88, %v274
    %v276 = vpop.f32.mrb[0].mxu0
    %v277 = vpop.f32.mrb[0].mxu0
    %278 = vdwg.mxu0
    %279 = vmatprep.subr.bf16.mxu0 %v166
    %280 = vmatpush1.bf16.msra.mxu0 %v165
    %281 = vmatprep.subr.bf16.mxu0 %v174
    %282 = vmatpush1.bf16.msra.mxu0 %v173
    %283 = vmatprep.subr.bf16.mxu0 0
    %284 = vmatpush1.bf16.msra.mxu0 0
    %285 = vmatprep.subr.bf16.mxu0 0
    %286 = vmatpush1.bf16.msra.mxu0 0
    %287 = vmatprep.subr.bf16.mxu0 0
    %288 = vmatpush1.bf16.msra.mxu0 0
    %289 = vmatprep.subr.bf16.mxu0 0
    %290 = vmatpush1.bf16.msra.mxu0 0
    %291 = vmatprep.subr.bf16.mxu0 0
    %292 = vmatpush1.bf16.msra.mxu0 0
    %293 = vmatprep.subr.bf16.mxu0 0
    %294 = vmatpush1.bf16.msra.mxu0 0
    %295 = vmatprep.subr.bf16.mxu0 0
    %296 = vmatpush1.bf16.msra.mxu0 0
    %297 = vmatprep.subr.bf16.mxu0 0
    %298 = vmatpush1.bf16.msra.mxu0 0
    %299 = vmatprep.subr.bf16.mxu0 0
    %300 = vmatpush1.bf16.msra.mxu0 0
    %301 = vmatprep.subr.bf16.mxu0 0
    %302 = vmatpush1.bf16.msra.mxu0 0
    %303 = vmatprep.subr.bf16.mxu0 0
    %304 = vmatpush1.bf16.msra.mxu0 0
    %305 = vmatprep.subr.bf16.mxu0 0
    %306 = vmatpush1.bf16.msra.mxu0 0
    %307 = vmatprep.subr.bf16.mxu0 0
    %308 = vmatpush1.bf16.msra.mxu0 0
    %309 = vmatprep.subr.bf16.mxu0 0
    %310 = vmatpush1.bf16.msra.mxu0 0
    %311 = vmatprep.mubr.bf16.mxu0 0
    %312 = vmatmul.mubr.bf16.gmra.mrb[0].mxu0 %v195
    %v313 = vpop.f32.mrb[0].mxu0
    %v314 = vadd.f32 %v92, %v313
    %v315 = vpop.f32.mrb[0].mxu0
    %v316 = vadd.f32 %v96, %v315
    %v317 = vpop.f32.mrb[0].mxu0
    %v318 = vpop.f32.mrb[0].mxu0
    %319 = vdwg.mxu0
    %320 = vmatprep.subr.bf16.mxu0 %v168
    %321 = vmatpush1.bf16.msra.mxu0 %v167
    %322 = vmatprep.subr.bf16.mxu0 %v176
    %323 = vmatpush1.bf16.msra.mxu0 %v175
    %324 = vmatprep.subr.bf16.mxu0 0
    %325 = vmatpush1.bf16.msra.mxu0 0
    %326 = vmatprep.subr.bf16.mxu0 0
    %327 = vmatpush1.bf16.msra.mxu0 0
    %328 = vmatprep.subr.bf16.mxu0 0
    %329 = vmatpush1.bf16.msra.mxu0 0
    %330 = vmatprep.subr.bf16.mxu0 0
    %331 = vmatpush1.bf16.msra.mxu0 0
    %332 = vmatprep.subr.bf16.mxu0 0
    %333 = vmatpush1.bf16.msra.mxu0 0
    %334 = vmatprep.subr.bf16.mxu0 0
    %335 = vmatpush1.bf16.msra.mxu0 0
    %336 = vmatprep.subr.bf16.mxu0 0
    %337 = vmatpush1.bf16.msra.mxu0 0
    %338 = vmatprep.subr.bf16.mxu0 0
    %339 = vmatpush1.bf16.msra.mxu0 0
    %340 = vmatprep.subr.bf16.mxu0 0
    %341 = vmatpush1.bf16.msra.mxu0 0
    %342 = vmatprep.subr.bf16.mxu0 0
    %343 = vmatpush1.bf16.msra.mxu0 0
    %344 = vmatprep.subr.bf16.mxu0 0
    %345 = vmatpush1.bf16.msra.mxu0 0
    %346 = vmatprep.subr.bf16.mxu0 0
    %347 = vmatpush1.bf16.msra.mxu0 0
    %348 = vmatprep.subr.bf16.mxu0 0
    %349 = vmatpush1.bf16.msra.mxu0 0
    %350 = vmatprep.subr.bf16.mxu0 0
    %351 = vmatpush1.bf16.msra.mxu0 0
    %352 = vmatprep.mubr.bf16.mxu0 0
    %353 = vmatmul.mubr.bf16.gmra.mrb[0].mxu0 %v195
    %v354 = vpop.f32.mrb[0].mxu0
    %v355 = vadd.f32 %v100, %v354
    %v356 = vpop.f32.mrb[0].mxu0
    %v357 = vadd.f32 %v104, %v356
    %v358 = vpop.f32.mrb[0].mxu0
    %v359 = vpop.f32.mrb[0].mxu0
    %360 = vdwg.mxu0
    %361 = vst [vmem:[#allocation8] sm:$0xff] %v232
    %362 = vst [vmem:[#allocation8 + $0x8] sm:$0xff] %v234
    %363 = vst [vmem:[#allocation8 + $0x10] sm:$0xff] %v273
    %364 = vst [vmem:[#allocation8 + $0x18] sm:$0xff] %v275
    %365 = vst [vmem:[#allocation8 + $0x20] sm:$0xff] %v314
    %366 = vst [vmem:[#allocation8 + $0x28] sm:$0xff] %v316
    %367 = vst [vmem:[#allocation8 + $0x30] sm:$0xff] %v355
    %vm368 = vcmask 850944
    %369 = vst.msk [vmem:[#allocation8 + $0x38] sm:$0xff] %vm368, %v357
    // Predicated region
    $region26: #{linear_classifier_forward.1} parent=1 // pred_check
      _
    $region27: #{linear_classifier_forward.1} parent=1 // pred_check_branch
      %371 = sbr.rel (0) target = $region29
    $region28: #{linear_classifier_forward.1} parent=1 // pred_region
      %s373 = ssub.s32 1024, 1024
      %374 = vsyncadd [#allocation4], %s373
      %s376 = sshll.u32 [#allocation8], 4
      %s377 = int_to_ptr.vmem [resolvable:$true] %s376
      %379 = dma.vmem_to_hbm [thread:$0]  %s377, 1024, %s3, [#allocation4]
    $region29: #{linear_classifier_forward.1} parent=1 // pred_fallthru
      _
    // Predicated region
    $region30: #{linear_classifier_forward.1} parent=1 // pred_check
      _
    $region31: #{linear_classifier_forward.1} parent=1 // pred_check_branch
      %381 = sbr.rel (0) target = $region33
    $region32: #{linear_classifier_forward.1} parent=1 // pred_region
      %382 = dma.done [#allocation4], 1024
    $region33: #{linear_classifier_forward.1} parent=1 // pred_fallthru
      _
    %383 = vsyncpa [#allocation3], 1
    %384 = vsyncpa [#allocation6], 1
    %385 = vsyncpa [#allocation4], 1

</llo_original>
